<compile_context>
chip_gen: v7x
topology: tpu7x:2x2x1
jax: 0.10.0
libtpu: 0.0.40
codegen_flags: <defaults>
</compile_context>

<pallas_src>
import numpy as np

import jax
import jax.numpy as jnp
from jax import lax
from jax.experimental import pallas as pl
from jax.experimental.pallas import tpu as pltpu

HEADS = 4
NEG_BIG = -1e30   # effectively -inf for masked (non-edge) attention entries
OUT_W = 128       # lane-dense packed output width of the head kernel

_VM = pl.BlockSpec(memory_space=pltpu.MemorySpace.VMEM)


# ----------------------------------------------------------------------------
# helpers: generation-aware VMEM budgeting + destination-row tile selection
# ----------------------------------------------------------------------------
def _round_up(x, m):
    return ((x + m - 1) // m) * m


def _vmem_capacity_bytes():
    try:
        cap = int(pltpu.get_tpu_info().vmem_capacity_bytes)
        if cap > 0:
            return cap
    except Exception:
        pass
    try:
        if "v7" in jax.devices()[0].device_kind.lower():
            return 64 * 1024 * 1024      # v7x: 64 MiB per TensorCore
    except Exception:
        pass
    return 128 * 1024 * 1024             # v5e / v6e


def _pick_dst_tile(n, heads, d, vmem_limit):
    """Largest destination-row tile (multiple of 8, capped at 512) whose
    double-buffered streamed operands plus the resident projection blocks fit
    the per-core VMEM budget.  Never falls back to whole-N; callers pad N."""
    n8 = _round_up(max(n, 8), 8)
    resident = 2 * (heads * n8 * d * 4        # xp_flat (H*N, D) f32
                    + heads * 8 * n8 * 4      # a_src (H,1,N), sublane-padded
                    + 8 * 128 * 4)            # layer bias
    per_row = 2 * (heads * n8 * 2             # bf16 masked-bias tile (H, tn, N)
                   + heads * 128 * 4          # a_dst tile, lane-padded
                   + 128 * 4)                 # f32 output tile, lane-padded
    avail = max(vmem_limit - resident - (2 << 20), 8 * per_row)
    tn = min(512, avail // per_row, n8)
    return max(8, int(tn) // 8 * 8)


# ----------------------------------------------------------------------------
# Kernel 1: per-layer projection (run ONCE per layer, hoisted out of the grid)
#   xh    = x @ W_h                      (N, D)     for every head
#   a_src = <att_src_h, xh_j>            (H, 1, N)
#   a_dst = <att_dst_h, xh_i>            (H, N, 1)
# ----------------------------------------------------------------------------
def _proj_kernel(x_ref, w_ref, asw_ref, adw_ref, xp_ref, asrc_ref, adst_ref):
    H = w_ref.shape[0]
    x = x_ref[...]                          # (Np, F)
    asw = asw_ref[...]                      # (H, D)
    adw = adw_ref[...]                      # (H, D)
    for h in range(H):
        xh = jnp.dot(x, w_ref[h], preferred_element_type=jnp.float32)       # (Np, D)
        xp_ref[h] = xh
        adst_ref[h] = jnp.sum(xh * adw[h:h + 1, :], axis=1, keepdims=True)  # (Np, 1)
        asrc_ref[h] = lax.dot_general(asw[h:h + 1, :], xh,
                                      (((1,), (1,)), ((), ())),
                                      preferred_element_type=jnp.float32)   # (1, Np)


# ----------------------------------------------------------------------------
# Kernel 2: dense masked GAT attention (heads=4, concat=False -> mean) + ReLU.
# Gridded over destination-row tiles; all projections / bias precomputed.
# ----------------------------------------------------------------------------
def _gat_attn_kernel(xp_ref, a_src_ref, a_dst_ref, bias_ref, b_ref, out_ref):
    H = a_src_ref.shape[0]
    n_src = a_src_ref.shape[2]
    tn, D = out_ref.shape

    ps = []
    for h in range(H):
        # additive bias already contains the edge term AND the -inf edge mask
        z = a_dst_ref[h] + a_src_ref[h] + bias_ref[h].astype(jnp.float32)   # (tn, N)
        z = jnp.where(z > 0, z, 0.2 * z)                  # leaky_relu(0.2)
        m = jnp.max(z, axis=1, keepdims=True)
        p = jnp.exp(z - m)
        inv = pl.reciprocal(jnp.sum(p, axis=1, keepdims=True), approx=True)
        ps.append(p * inv)

    if n_src % 128 == 0:
        # one long-K MXU matmul: (tn, H*N) @ (H*N, D)
        p_cat = jnp.concatenate(ps, axis=1)
        acc = jnp.dot(p_cat, xp_ref[...], preferred_element_type=jnp.float32)
    else:
        # tiny-graph fallback (lane width < 128): per-head accumulate
        acc = jnp.zeros((tn, D), jnp.float32)
        for h in range(H):
            xh = xp_ref[pl.ds(h * n_src, n_src), :]
            acc = acc + jnp.dot(ps[h], xh, preferred_element_type=jnp.float32)

    out = acc * (1.0 / H) + b_ref[...]                    # concat=False -> mean, + bias
    out_ref[...] = jnp.maximum(out, 0.0)                  # F.relu from module forward


# ----------------------------------------------------------------------------
# Kernel 3: global mean pool (tiny):  gmean = (S^T @ h) * inv_counts
# ----------------------------------------------------------------------------
def _pool_kernel(sgt_ref, h_ref, inv_ref, gmean_ref):
    gsum = jnp.dot(sgt_ref[...], h_ref[...], preferred_element_type=jnp.float32)
    gmean_ref[...] = gsum * inv_ref[...]


# ----------------------------------------------------------------------------
# Kernel 4: actor + critic heads, row-gridded.  Actor/critic layer-1 matmuls are
# fused (2D-wide hidden slab); layer-2 weights are packed into one lane-dense
# (2D, 128) matrix so the kernel emits the packed (tm, 128) output directly
# (cols [0:n_actions] = logits, col n_actions = value).
# ----------------------------------------------------------------------------
def _head_kernel(h_ref, sg_ref, gmean_ref, w1h_ref, w1m_ref, b1_ref,
                 w2_ref, b2_ref, out_ref):
    h = h_ref[...]                                                            # (tm, D)
    mf = jnp.dot(sg_ref[...], gmean_ref[...], preferred_element_type=jnp.float32)
    hid = (jnp.dot(h, w1h_ref[...], preferred_element_type=jnp.float32)
           + jnp.dot(mf, w1m_ref[...], preferred_element_type=jnp.float32)
           + b1_ref[...])
    hid = jnp.maximum(hid, 0.0)                                               # (tm, 2D)
    out_ref[...] = jnp.dot(hid, w2_ref[...],
                           preferred_element_type=jnp.float32) + b2_ref[...]  # (tm, 128)


# ----------------------------------------------------------------------------
# Wrappers
# ----------------------------------------------------------------------------
def gat_layer(x_p, params, adj, et, *, n_real, n_pad, tn, vmem_limit):
    H, D = params["att_src"].shape
    F = x_p.shape[1]
    edge_dim = params["w_edge"].shape[0]

    # --- plain-JAX parameter / graph preprocessing (per review: precompute the
    #     per-head edge-attention bias with the adjacency mask folded in, bf16) ---
    w3 = params["w"].reshape(F, H, D).transpose(1, 0, 2)                       # (H, F, D)
    coeff = jnp.einsum("khd,hd->kh",
                       params["w_edge"].reshape(edge_dim, H, D),
                       params["att_edge"])                                     # (edge_dim, H)
    bias = jnp.einsum("kij,kh->hij", et, coeff)                                # (H, N, N)
    bias = bias + jnp.where(adj > 0, 0.0, NEG_BIG)[None, :, :]
    pad = n_pad - n_real
    if pad:
        bias = jnp.pad(bias, ((0, 0), (0, pad), (0, pad)), constant_values=NEG_BIG)
    bias = bias.astype(jnp.bfloat16)

    # --- projection kernel: x@W, a_src, a_dst computed ONCE per layer ---
    xp, a_src, a_dst = pl.pallas_call(
        _proj_kernel,
        out_shape=(jax.ShapeDtypeStruct((H, n_pad, D), jnp.float32),
                   jax.ShapeDtypeStruct((H, 1, n_pad), jnp.float32),
                   jax.ShapeDtypeStruct((H, n_pad, 1), jnp.float32)),
        in_specs=[_VM] * 4,
        out_specs=(_VM, _VM, _VM),
    )(x_p, w3, params["att_src"], params["att_dst"])
    xp_flat = xp.reshape(H * n_pad, D)      # heads stacked along the contraction axis

    # --- attention kernel, gridded over destination-row tiles ---
    grid = (n_pad // tn,)
    return pl.pallas_call(
        _gat_attn_kernel,
        out_shape=jax.ShapeDtypeStruct((n_pad, D), jnp.float32),
        grid=grid,
        in_specs=[
            pl.BlockSpec((H * n_pad, D), lambda i: (0, 0)),       # xp_flat   (resident)
            pl.BlockSpec((H, 1, n_pad), lambda i: (0, 0, 0)),     # a_src     (resident)
            pl.BlockSpec((H, tn, 1), lambda i: (0, i, 0)),        # a_dst tile
            pl.BlockSpec((H, tn, n_pad), lambda i: (0, i, 0)),    # masked bias tile (bf16)
            pl.BlockSpec((1, D), lambda i: (0, 0)),               # layer bias
        ],
        out_specs=pl.BlockSpec((tn, D), lambda i: (i, 0)),
        compiler_params=pltpu.CompilerParams(
            dimension_semantics=("parallel",),
            vmem_limit_bytes=vmem_limit),
    )(xp_flat, a_src, a_dst, bias, params["bias"])


def heads_layer(h, sg, sgt, inv_counts, params, n_actions, tm=None):
    N, D = h.shape
    G = sg.shape[1]

    # tiny pool kernel: per-graph means
    gmean = pl.pallas_call(
        _pool_kernel,
        out_shape=jax.ShapeDtypeStruct((G, D), jnp.float32),
        in_specs=[_VM] * 3,
        out_specs=_VM,
    )(sgt, h, inv_counts)

    # pack weights: fuse actor/critic layer-1; pack layer-2 into a lane-dense slab
    w1h = jnp.concatenate([params["aw1h"], params["cw1h"]], axis=1)            # (D, 2D)
    w1m = jnp.concatenate([params["aw1m"], params["cw1m"]], axis=1)            # (D, 2D)
    b1 = jnp.concatenate([params["ab1"], params["cb1"]], axis=1)               # (1, 2D)
    w2 = (jnp.zeros((2 * D, OUT_W), jnp.float32)
          .at[:D, :n_actions].set(params["aw2"])
          .at[D:, n_actions].set(params["cw2"][:, 0]))                         # (2D, 128)
    b2 = (jnp.zeros((1, OUT_W), jnp.float32)
          .at[:, :n_actions].set(params["ab2"])
          .at[:, n_actions].set(params["cb2"][:, 0]))                          # (1, 128)

    if tm is None:
        tm = 256
    tm = max(8, (min(tm, _round_up(N, 8)) // 8) * 8)
    n_pad = _round_up(N, tm)
    pad = n_pad - N
    h_p = jnp.pad(h, ((0, pad), (0, 0))) if pad else h
    sg_p = jnp.pad(sg, ((0, pad), (0, 0))) if pad else sg

    out = pl.pallas_call(
        _head_kernel,
        out_shape=jax.ShapeDtypeStruct((n_pad, OUT_W), jnp.float32),
        grid=(n_pad // tm,),
        in_specs=[
            pl.BlockSpec((tm, D), lambda i: (i, 0)),
            pl.BlockSpec((tm, G), lambda i: (i, 0)),
            pl.BlockSpec((G, D), lambda i: (0, 0)),
            pl.BlockSpec((D, 2 * D), lambda i: (0, 0)),
            pl.BlockSpec((D, 2 * D), lambda i: (0, 0)),
            pl.BlockSpec((1, 2 * D), lambda i: (0, 0)),
            pl.BlockSpec((2 * D, OUT_W), lambda i: (0, 0)),
            pl.BlockSpec((1, OUT_W), lambda i: (0, 0)),
        ],
        out_specs=pl.BlockSpec((tm, OUT_W), lambda i: (i, 0)),
        compiler_params=pltpu.CompilerParams(
            dimension_semantics=("parallel",)),
    )(h_p, sg_p, gmean, w1h, w1m, b1, w2, b2)
    out = out[:N]
    return out[:, :n_actions], out[:, n_actions]


def mf_gnn_actor_critic_forward(x, adj, et, sg, sgt, inv_counts,
                                p1, p2, ph, n_actions, tn=None, tm=None):
    N = x.shape[0]
    H, D = p1["att_src"].shape

    cap = _vmem_capacity_bytes()
    vmem_limit = min(int(cap * 3 // 4), 112 * 1024 * 1024)
    if tn is None:
        tn = _pick_dst_tile(N, H, D, vmem_limit)
    tn = max(8, (int(tn) // 8) * 8)
    n_pad = _round_up(N, tn)                 # pad instead of whole-N fallback
    x_p = jnp.pad(x, ((0, n_pad - N), (0, 0))) if n_pad > N else x

    # TODO(synk): fuse the two GAT layers into a single pallas_call (h resident in
    # VMEM scratch); skipped because the hoisted per-layer projections depend on the
    # full previous-layer output, and the (N, D) round-trip is tiny vs. the bias stream.
    h = gat_layer(x_p, p1, adj, et, n_real=N, n_pad=n_pad, tn=tn, vmem_limit=vmem_limit)
    h = gat_layer(h, p2, adj, et, n_real=N, n_pad=n_pad, tn=tn, vmem_limit=vmem_limit)
    h = h[:N] if n_pad > N else h
    return heads_layer(h, sg, sgt, inv_counts, ph, n_actions, tm=tm)


# ----------------------------------------------------------------------------
# Pure-JAX reference (same dense formulation) for a correctness check.
# ----------------------------------------------------------------------------
def _gat_ref(x, p, adj, et):
    H, D = p["att_src"].shape
    hp = lax.Precision.HIGHEST
    xp = jnp.dot(x, p["w"], precision=hp)
    outs = 0.0
    for h in range(H):
        xh = xp[:, h * D:(h + 1) * D]
        a_src = jnp.dot(xh, p["att_src"][h], precision=hp)
        a_dst = jnp.dot(xh, p["att_dst"][h], precision=hp)
        v_h = jnp.dot(p["w_edge"][:, h * D:(h + 1) * D], p["att_edge"][h], precision=hp)
        ae = jnp.einsum("kij,k->ij", et, v_h, precision=hp)
        z = a_dst[:, None] + a_src[None, :] + ae
        z = jnp.where(z > 0, z, 0.2 * z)
        z = jnp.where(adj > 0, z, NEG_BIG)
        a = jax.nn.softmax(z, axis=1)
        outs = outs + jnp.dot(a, xh, precision=hp)
    return jnp.maximum(outs / H + p["bias"], 0.0)


def _heads_ref(h, sg, sgt, inv_counts, p):
    hp = lax.Precision.HIGHEST
    mf = jnp.dot(sg, jnp.dot(sgt, h, precision=hp) * inv_counts, precision=hp)
    a_hid = jnp.maximum(jnp.dot(h, p["aw1h"], precision=hp)
                        + jnp.dot(mf, p["aw1m"], precision=hp) + p["ab1"], 0.0)
    logits = jnp.dot(a_hid, p["aw2"], precision=hp) + p["ab2"]
    c_hid = jnp.maximum(jnp.dot(h, p["cw1h"], precision=hp)
                        + jnp.dot(mf, p["cw1m"], precision=hp) + p["cb1"], 0.0)
    values = jnp.dot(c_hid, p["cw2"], precision=hp) + p["cb2"]
    return logits, values[:, 0]


# ----------------------------------------------------------------------------
# Deterministic parameter / graph construction (plain-JAX glue)
# ----------------------------------------------------------------------------
def make_gat_params(key, in_dim, hidden, edge_dim, heads):
    ks = jax.random.split(key, 6)
    return {
        "w":        0.1 * jax.random.normal(ks[0], (in_dim, heads * hidden), jnp.float32),
        "att_src":  0.1 * jax.random.normal(ks[1], (heads, hidden), jnp.float32),
        "att_dst":  0.1 * jax.random.normal(ks[2], (heads, hidden), jnp.float32),
        "w_edge":   0.1 * jax.random.normal(ks[3], (edge_dim, heads * hidden), jnp.float32),
        "att_edge": 0.1 * jax.random.normal(ks[4], (heads, hidden), jnp.float32),
        "bias":     0.1 * jax.random.normal(ks[5], (1, hidden), jnp.float32),
    }


def make_head_params(key, hidden, n_actions):
    ks = jax.random.split(key, 8)
    return {
        "aw1h": 0.1 * jax.random.normal(ks[0], (hidden, hidden), jnp.float32),
        "aw1m": 0.1 * jax.random.normal(ks[1], (hidden, hidden), jnp.float32),
        "ab1":  0.1 * jax.random.normal(ks[2], (1, hidden), jnp.float32),
        "aw2":  0.1 * jax.random.normal(ks[3], (hidden, n_actions), jnp.float32),
        "ab2":  0.1 * jax.random.normal(ks[4], (1, n_actions), jnp.float32),
        "cw1h": 0.1 * jax.random.normal(ks[5], (hidden, hidden), jnp.float32),
        "cw1m": 0.1 * jax.random.normal(ks[6], (hidden, hidden), jnp.float32),
        "cb1":  jnp.zeros((1, hidden), jnp.float32),
        "cw2":  0.1 * jax.random.normal(ks[7], (hidden, 1), jnp.float32),
        "cb2":  jnp.zeros((1, 1), jnp.float32),
    }


def build_dense_graph(edge_index, edge_attr, n_nodes):
    """Edge list -> dense adjacency + dense edge attrs, with PyG-style self
    loops (add_self_loops=True, fill_value='mean' over incoming edges)."""
    src, dst = edge_index[0], edge_index[1]
    edge_dim = edge_attr.shape[-1]

    pairs = np.asarray(jnp.stack([dst, src], axis=1))
    assert np.unique(pairs, axis=0).shape[0] == pairs.shape[0], \
        "duplicate (dst, src) edges are not supported by the dense formulation"

    deg = jax.ops.segment_sum(jnp.ones_like(dst, jnp.float32), dst, num_segments=n_nodes)
    sums = jax.ops.segment_sum(edge_attr, dst, num_segments=n_nodes)
    fill = sums / jnp.maximum(deg, 1.0)[:, None]

    adj = jnp.zeros((n_nodes, n_nodes), jnp.float32).at[dst, src].set(1.0)
    e_dense = jnp.zeros((n_nodes, n_nodes, edge_dim), jnp.float32).at[dst, src].set(edge_attr)

    idx = jnp.arange(n_nodes)
    adj = adj.at[idx, idx].set(1.0)          # self-loops guarantee every row has an edge
    e_dense = e_dense.at[idx, idx].set(fill)

    et = jnp.transpose(e_dense, (2, 0, 1))   # (edge_dim, N_dst, N_src)
    return adj, et


def build_pool_operands(batch, num_graphs):
    """Low-rank pooling operands: one-hot S (N,G), S^T (G,N), inverse counts (G,1)."""
    sg = jax.nn.one_hot(batch, num_graphs, dtype=jnp.float32)
    counts = jnp.sum(sg, axis=0)
    inv_counts = (1.0 / jnp.maximum(counts, 1.0))[:, None]
    return sg, sg.T, inv_counts


# ----------------------------------------------------------------------------
if __name__ == "__main__":
    node_feat_dim, edge_dim, gnn_hidden_dim, n_actions = 8, 4, 32, 5
    nodes_per_graph, num_graphs = 16, 2
    N = nodes_per_graph * num_graphs   # 32 nodes total

    key = jax.random.PRNGKey(0)
    k_x, k_e, k_g1, k_g2, k_h = jax.random.split(key, 5)

    # graph: a bidirectional ring inside each of the 2 graphs
    src_list, dst_list = [], []
    for g in range(num_graphs):
        off = g * nodes_per_graph
        for i in range(nodes_per_graph):
            a, b = off + i, off + (i + 1) % nodes_per_graph
            src_list += [a, b]
            dst_list += [b, a]
    edge_index = jnp.array([src_list, dst_list], dtype=jnp.int32)          # (2, E)
    edge_attr = jax.random.normal(k_e, (edge_index.shape[1], edge_dim), jnp.float32)
    batch = jnp.repeat(jnp.arange(num_graphs, dtype=jnp.int32), nodes_per_graph)
    x = jax.random.normal(k_x, (N, node_feat_dim), jnp.float32)

    # parameters (deterministic, synthetic)
    p_gat1 = make_gat_params(k_g1, node_feat_dim, gnn_hidden_dim, edge_dim, HEADS)
    p_gat2 = make_gat_params(k_g2, gnn_hidden_dim, gnn_hidden_dim, edge_dim, HEADS)
    p_head = make_head_params(k_h, gnn_hidden_dim, n_actions)

    # glue: edge-list -> dense structures, low-rank pooling operands
    adj, et = build_dense_graph(edge_index, edge_attr, N)
    sg, sgt, inv_counts = build_pool_operands(batch, num_graphs)

    # reference (pure JAX, same dense math)
    h_ref = _gat_ref(_gat_ref(x, p_gat1, adj, et), p_gat2, adj, et)
    logits_ref, values_ref = _heads_ref(h_ref, sg, sgt, inv_counts, p_head)

    # run 1: tn=16 -> grid=(2,), per-head matmul fallback path, no padding
    logits, values = mf_gnn_actor_critic_forward(
        x, adj, et, sg, sgt, inv_counts, p_gat1, p_gat2, p_head, n_actions, tn=16, tm=16)
    logits, values = jax.block_until_ready((logits, values))
    assert logits.shape == (N, n_actions) and values.shape == (N,)
    assert jnp.max(jnp.abs(logits - logits_ref)) < 1e-2
    assert jnp.max(jnp.abs(values - values_ref)) < 1e-2

    # run 2: tn=128 -> N padded to 128, fused long-K attention matmul path
    logits2, values2 = mf_gnn_actor_critic_forward(
        x, adj, et, sg, sgt, inv_counts, p_gat1, p_gat2, p_head, n_actions, tn=128)
    logits2, values2 = jax.block_until_ready((logits2, values2))
    assert jnp.max(jnp.abs(logits2 - logits_ref)) < 1e-2
    assert jnp.max(jnp.abs(values2 - values_ref)) < 1e-2

    print("KERNEL_OK")
</pallas_src>

<mosaic_0001>
module attributes {stable_mosaic.version = 11 : i64} {
  func.func @_proj_kernel(%arg0: memref<32x8xf32, #tpu.memory_space<vmem>>, %arg1: memref<4x8x32xf32, #tpu.memory_space<vmem>>, %arg2: memref<4x32xf32, #tpu.memory_space<vmem>>, %arg3: memref<4x32xf32, #tpu.memory_space<vmem>>, %arg4: memref<4x32x32xf32, #tpu.memory_space<vmem>>, %arg5: memref<4x1x32xf32, #tpu.memory_space<vmem>>, %arg6: memref<4x32x1xf32, #tpu.memory_space<vmem>>) attributes {dimension_semantics = [], scalar_prefetch = 0 : i64, scratch_operands = 0 : i64, tpu.core_type = #tpu.core_type<tc>} {
    %c0 = arith.constant 0 : index
    %c0_0 = arith.constant 0 : index
    %0 = vector.load %arg0[%c0, %c0_0] : memref<32x8xf32, #tpu.memory_space<vmem>>, vector<32x8xf32>
    %c0_1 = arith.constant 0 : index
    %c0_2 = arith.constant 0 : index
    %1 = vector.load %arg2[%c0_1, %c0_2] : memref<4x32xf32, #tpu.memory_space<vmem>>, vector<4x32xf32>
    %c0_3 = arith.constant 0 : index
    %c0_4 = arith.constant 0 : index
    %2 = vector.load %arg3[%c0_3, %c0_4] : memref<4x32xf32, #tpu.memory_space<vmem>>, vector<4x32xf32>
    %c0_5 = arith.constant 0 : index
    %c0_6 = arith.constant 0 : index
    %c0_7 = arith.constant 0 : index
    %3 = vector.load %arg1[%c0_5, %c0_6, %c0_7] : memref<4x8x32xf32, #tpu.memory_space<vmem>>, vector<1x8x32xf32>
    %4 = vector.shape_cast %3 : vector<1x8x32xf32> to vector<8x32xf32>
    %cst = arith.constant dense<0.000000e+00> : vector<32x32xf32>
    %5 = tpu.matmul %0, %4, %cst {dimension_numbers = #tpu.dot_dimension_numbers<[1], [0], [0], [1], [0, 0, 1, 1], [], []>} : vector<32x8xf32>, vector<8x32xf32>, vector<32x32xf32> -> vector<32x32xf32>
    %c0_8 = arith.constant 0 : index
    %c0_9 = arith.constant 0 : index
    %c0_10 = arith.constant 0 : index
    %6 = vector.load %arg4[%c0_8, %c0_9, %c0_10] : memref<4x32x32xf32, #tpu.memory_space<vmem>>, vector<1x32x32xf32>
    %7 = vector.shape_cast %6 : vector<1x32x32xf32> to vector<32x32xf32>
    %8 = vector.shape_cast %5 : vector<32x32xf32> to vector<1x32x32xf32>
    tpu.vector_store %arg4[%c0_8, %c0_9, %c0_10], %8 {strides = array<i32>} : memref<4x32x32xf32, #tpu.memory_space<vmem>>, vector<1x32x32xf32>,
    %9 = vector.extract_strided_slice %2 {offsets = [0, 0], sizes = [1, 32], strides = [1, 1]} : vector<4x32xf32> to vector<1x32xf32>
    %10 = vector.broadcast %9 : vector<1x32xf32> to vector<32x32xf32>
    %11 = arith.mulf %5, %10 : vector<32x32xf32>
    %cst_11 = arith.constant dense<0.000000e+00> : vector<32xf32>
    %12 = vector.multi_reduction <add>, %11, %cst_11 [1] : vector<32x32xf32> to vector<32xf32>
    %13 = vector.shape_cast %12 : vector<32xf32> to vector<32x1xf32>
    %c0_12 = arith.constant 0 : index
    %c0_13 = arith.constant 0 : index
    %c0_14 = arith.constant 0 : index
    %14 = vector.load %arg6[%c0_12, %c0_13, %c0_14] : memref<4x32x1xf32, #tpu.memory_space<vmem>>, vector<1x32x1xf32>
    %15 = vector.shape_cast %14 : vector<1x32x1xf32> to vector<32x1xf32>
    %16 = vector.shape_cast %13 : vector<32x1xf32> to vector<1x32x1xf32>
    tpu.vector_store %arg6[%c0_12, %c0_13, %c0_14], %16 {strides = array<i32>} : memref<4x32x1xf32, #tpu.memory_space<vmem>>, vector<1x32x1xf32>,
    %17 = vector.extract_strided_slice %1 {offsets = [0, 0], sizes = [1, 32], strides = [1, 1]} : vector<4x32xf32> to vector<1x32xf32>
    %cst_15 = arith.constant dense<0.000000e+00> : vector<1x32xf32>
    %18 = tpu.matmul %17, %5, %cst_15 {dimension_numbers = #tpu.dot_dimension_numbers<[1], [1], [0], [0], [0, 0, 1, 0], [], []>} : vector<1x32xf32>, vector<32x32xf32>, vector<1x32xf32> -> vector<1x32xf32>
    %c0_16 = arith.constant 0 : index
    %c0_17 = arith.constant 0 : index
    %c0_18 = arith.constant 0 : index
    %19 = vector.load %arg5[%c0_16, %c0_17, %c0_18] : memref<4x1x32xf32, #tpu.memory_space<vmem>>, vector<1x1x32xf32>
    %20 = vector.shape_cast %19 : vector<1x1x32xf32> to vector<1x32xf32>
    %21 = vector.shape_cast %18 : vector<1x32xf32> to vector<1x1x32xf32>
    tpu.vector_store %arg5[%c0_16, %c0_17, %c0_18], %21 {strides = array<i32>} : memref<4x1x32xf32, #tpu.memory_space<vmem>>, vector<1x1x32xf32>,
    %c1 = arith.constant 1 : index
    %c0_19 = arith.constant 0 : index
    %c0_20 = arith.constant 0 : index
    %22 = vector.load %arg1[%c1, %c0_19, %c0_20] : memref<4x8x32xf32, #tpu.memory_space<vmem>>, vector<1x8x32xf32>
    %23 = vector.shape_cast %22 : vector<1x8x32xf32> to vector<8x32xf32>
    %cst_21 = arith.constant dense<0.000000e+00> : vector<32x32xf32>
    %24 = tpu.matmul %0, %23, %cst_21 {dimension_numbers = #tpu.dot_dimension_numbers<[1], [0], [0], [1], [0, 0, 1, 1], [], []>} : vector<32x8xf32>, vector<8x32xf32>, vector<32x32xf32> -> vector<32x32xf32>
    %c1_22 = arith.constant 1 : index
    %c0_23 = arith.constant 0 : index
    %c0_24 = arith.constant 0 : index
    %25 = vector.load %arg4[%c1_22, %c0_23, %c0_24] : memref<4x32x32xf32, #tpu.memory_space<vmem>>, vector<1x32x32xf32>
    %26 = vector.shape_cast %25 : vector<1x32x32xf32> to vector<32x32xf32>
    %27 = vector.shape_cast %24 : vector<32x32xf32> to vector<1x32x32xf32>
    tpu.vector_store %arg4[%c1_22, %c0_23, %c0_24], %27 {strides = array<i32>} : memref<4x32x32xf32, #tpu.memory_space<vmem>>, vector<1x32x32xf32>,
    %28 = vector.extract_strided_slice %2 {offsets = [1, 0], sizes = [1, 32], strides = [1, 1]} : vector<4x32xf32> to vector<1x32xf32>
    %29 = vector.broadcast %28 : vector<1x32xf32> to vector<32x32xf32>
    %30 = arith.mulf %24, %29 : vector<32x32xf32>
    %cst_25 = arith.constant dense<0.000000e+00> : vector<32xf32>
    %31 = vector.multi_reduction <add>, %30, %cst_25 [1] : vector<32x32xf32> to vector<32xf32>
    %32 = vector.shape_cast %31 : vector<32xf32> to vector<32x1xf32>
    %c1_26 = arith.constant 1 : index
    %c0_27 = arith.constant 0 : index
    %c0_28 = arith.constant 0 : index
    %33 = vector.load %arg6[%c1_26, %c0_27, %c0_28] : memref<4x32x1xf32, #tpu.memory_space<vmem>>, vector<1x32x1xf32>
    %34 = vector.shape_cast %33 : vector<1x32x1xf32> to vector<32x1xf32>
    %35 = vector.shape_cast %32 : vector<32x1xf32> to vector<1x32x1xf32>
    tpu.vector_store %arg6[%c1_26, %c0_27, %c0_28], %35 {strides = array<i32>} : memref<4x32x1xf32, #tpu.memory_space<vmem>>, vector<1x32x1xf32>,
    %36 = vector.extract_strided_slice %1 {offsets = [1, 0], sizes = [1, 32], strides = [1, 1]} : vector<4x32xf32> to vector<1x32xf32>
    %cst_29 = arith.constant dense<0.000000e+00> : vector<1x32xf32>
    %37 = tpu.matmul %36, %24, %cst_29 {dimension_numbers = #tpu.dot_dimension_numbers<[1], [1], [0], [0], [0, 0, 1, 0], [], []>} : vector<1x32xf32>, vector<32x32xf32>, vector<1x32xf32> -> vector<1x32xf32>
    %c1_30 = arith.constant 1 : index
    %c0_31 = arith.constant 0 : index
    %c0_32 = arith.constant 0 : index
    %38 = vector.load %arg5[%c1_30, %c0_31, %c0_32] : memref<4x1x32xf32, #tpu.memory_space<vmem>>, vector<1x1x32xf32>
    %39 = vector.shape_cast %38 : vector<1x1x32xf32> to vector<1x32xf32>
    %40 = vector.shape_cast %37 : vector<1x32xf32> to vector<1x1x32xf32>
    tpu.vector_store %arg5[%c1_30, %c0_31, %c0_32], %40 {strides = array<i32>} : memref<4x1x32xf32, #tpu.memory_space<vmem>>, vector<1x1x32xf32>,
    %c2 = arith.constant 2 : index
    %c0_33 = arith.constant 0 : index
    %c0_34 = arith.constant 0 : index
    %41 = vector.load %arg1[%c2, %c0_33, %c0_34] : memref<4x8x32xf32, #tpu.memory_space<vmem>>, vector<1x8x32xf32>
    %42 = vector.shape_cast %41 : vector<1x8x32xf32> to vector<8x32xf32>
    %cst_35 = arith.constant dense<0.000000e+00> : vector<32x32xf32>
    %43 = tpu.matmul %0, %42, %cst_35 {dimension_numbers = #tpu.dot_dimension_numbers<[1], [0], [0], [1], [0, 0, 1, 1], [], []>} : vector<32x8xf32>, vector<8x32xf32>, vector<32x32xf32> -> vector<32x32xf32>
    %c2_36 = arith.constant 2 : index
    %c0_37 = arith.constant 0 : index
    %c0_38 = arith.constant 0 : index
    %44 = vector.load %arg4[%c2_36, %c0_37, %c0_38] : memref<4x32x32xf32, #tpu.memory_space<vmem>>, vector<1x32x32xf32>
    %45 = vector.shape_cast %44 : vector<1x32x32xf32> to vector<32x32xf32>
    %46 = vector.shape_cast %43 : vector<32x32xf32> to vector<1x32x32xf32>
    tpu.vector_store %arg4[%c2_36, %c0_37, %c0_38], %46 {strides = array<i32>} : memref<4x32x32xf32, #tpu.memory_space<vmem>>, vector<1x32x32xf32>,
    %47 = vector.extract_strided_slice %2 {offsets = [2, 0], sizes = [1, 32], strides = [1, 1]} : vector<4x32xf32> to vector<1x32xf32>
    %48 = vector.broadcast %47 : vector<1x32xf32> to vector<32x32xf32>
    %49 = arith.mulf %43, %48 : vector<32x32xf32>
    %cst_39 = arith.constant dense<0.000000e+00> : vector<32xf32>
    %50 = vector.multi_reduction <add>, %49, %cst_39 [1] : vector<32x32xf32> to vector<32xf32>
    %51 = vector.shape_cast %50 : vector<32xf32> to vector<32x1xf32>
    %c2_40 = arith.constant 2 : index
    %c0_41 = arith.constant 0 : index
    %c0_42 = arith.constant 0 : index
    %52 = vector.load %arg6[%c2_40, %c0_41, %c0_42] : memref<4x32x1xf32, #tpu.memory_space<vmem>>, vector<1x32x1xf32>
    %53 = vector.shape_cast %52 : vector<1x32x1xf32> to vector<32x1xf32>
    %54 = vector.shape_cast %51 : vector<32x1xf32> to vector<1x32x1xf32>
    tpu.vector_store %arg6[%c2_40, %c0_41, %c0_42], %54 {strides = array<i32>} : memref<4x32x1xf32, #tpu.memory_space<vmem>>, vector<1x32x1xf32>,
    %55 = vector.extract_strided_slice %1 {offsets = [2, 0], sizes = [1, 32], strides = [1, 1]} : vector<4x32xf32> to vector<1x32xf32>
    %cst_43 = arith.constant dense<0.000000e+00> : vector<1x32xf32>
    %56 = tpu.matmul %55, %43, %cst_43 {dimension_numbers = #tpu.dot_dimension_numbers<[1], [1], [0], [0], [0, 0, 1, 0], [], []>} : vector<1x32xf32>, vector<32x32xf32>, vector<1x32xf32> -> vector<1x32xf32>
    %c2_44 = arith.constant 2 : index
    %c0_45 = arith.constant 0 : index
    %c0_46 = arith.constant 0 : index
    %57 = vector.load %arg5[%c2_44, %c0_45, %c0_46] : memref<4x1x32xf32, #tpu.memory_space<vmem>>, vector<1x1x32xf32>
    %58 = vector.shape_cast %57 : vector<1x1x32xf32> to vector<1x32xf32>
    %59 = vector.shape_cast %56 : vector<1x32xf32> to vector<1x1x32xf32>
    tpu.vector_store %arg5[%c2_44, %c0_45, %c0_46], %59 {strides = array<i32>} : memref<4x1x32xf32, #tpu.memory_space<vmem>>, vector<1x1x32xf32>,
    %c3 = arith.constant 3 : index
    %c0_47 = arith.constant 0 : index
    %c0_48 = arith.constant 0 : index
    %60 = vector.load %arg1[%c3, %c0_47, %c0_48] : memref<4x8x32xf32, #tpu.memory_space<vmem>>, vector<1x8x32xf32>
    %61 = vector.shape_cast %60 : vector<1x8x32xf32> to vector<8x32xf32>
    %cst_49 = arith.constant dense<0.000000e+00> : vector<32x32xf32>
    %62 = tpu.matmul %0, %61, %cst_49 {dimension_numbers = #tpu.dot_dimension_numbers<[1], [0], [0], [1], [0, 0, 1, 1], [], []>} : vector<32x8xf32>, vector<8x32xf32>, vector<32x32xf32> -> vector<32x32xf32>
    %c3_50 = arith.constant 3 : index
    %c0_51 = arith.constant 0 : index
    %c0_52 = arith.constant 0 : index
    %63 = vector.load %arg4[%c3_50, %c0_51, %c0_52] : memref<4x32x32xf32, #tpu.memory_space<vmem>>, vector<1x32x32xf32>
    %64 = vector.shape_cast %63 : vector<1x32x32xf32> to vector<32x32xf32>
    %65 = vector.shape_cast %62 : vector<32x32xf32> to vector<1x32x32xf32>
    tpu.vector_store %arg4[%c3_50, %c0_51, %c0_52], %65 {strides = array<i32>} : memref<4x32x32xf32, #tpu.memory_space<vmem>>, vector<1x32x32xf32>,
    %66 = vector.extract_strided_slice %2 {offsets = [3, 0], sizes = [1, 32], strides = [1, 1]} : vector<4x32xf32> to vector<1x32xf32>
    %67 = vector.broadcast %66 : vector<1x32xf32> to vector<32x32xf32>
    %68 = arith.mulf %62, %67 : vector<32x32xf32>
    %cst_53 = arith.constant dense<0.000000e+00> : vector<32xf32>
    %69 = vector.multi_reduction <add>, %68, %cst_53 [1] : vector<32x32xf32> to vector<32xf32>
    %70 = vector.shape_cast %69 : vector<32xf32> to vector<32x1xf32>
    %c3_54 = arith.constant 3 : index
    %c0_55 = arith.constant 0 : index
    %c0_56 = arith.constant 0 : index
    %71 = vector.load %arg6[%c3_54, %c0_55, %c0_56] : memref<4x32x1xf32, #tpu.memory_space<vmem>>, vector<1x32x1xf32>
    %72 = vector.shape_cast %71 : vector<1x32x1xf32> to vector<32x1xf32>
    %73 = vector.shape_cast %70 : vector<32x1xf32> to vector<1x32x1xf32>
    tpu.vector_store %arg6[%c3_54, %c0_55, %c0_56], %73 {strides = array<i32>} : memref<4x32x1xf32, #tpu.memory_space<vmem>>, vector<1x32x1xf32>,
    %74 = vector.extract_strided_slice %1 {offsets = [3, 0], sizes = [1, 32], strides = [1, 1]} : vector<4x32xf32> to vector<1x32xf32>
    %cst_57 = arith.constant dense<0.000000e+00> : vector<1x32xf32>
    %75 = tpu.matmul %74, %62, %cst_57 {dimension_numbers = #tpu.dot_dimension_numbers<[1], [1], [0], [0], [0, 0, 1, 0], [], []>} : vector<1x32xf32>, vector<32x32xf32>, vector<1x32xf32> -> vector<1x32xf32>
    %c3_58 = arith.constant 3 : index
    %c0_59 = arith.constant 0 : index
    %c0_60 = arith.constant 0 : index
    %76 = vector.load %arg5[%c3_58, %c0_59, %c0_60] : memref<4x1x32xf32, #tpu.memory_space<vmem>>, vector<1x1x32xf32>
    %77 = vector.shape_cast %76 : vector<1x1x32xf32> to vector<1x32xf32>
    %78 = vector.shape_cast %75 : vector<1x32xf32> to vector<1x1x32xf32>
    tpu.vector_store %arg5[%c3_58, %c0_59, %c0_60], %78 {strides = array<i32>} : memref<4x1x32xf32, #tpu.memory_space<vmem>>, vector<1x1x32xf32>,
    return
  }
}

</mosaic_0001>

<llo_original>
// kernel: tpu_custom_call.1
$region0: #{tpu_custom_call.1}
  #allocation0 [shape = 'u32[]', space=smem, size = 0x4, offset = 0x4, fixed_abs, tag = 'smem constant byte address 0x4 - core index']
  #allocation1 [shape = 'u32[144,128]{1,0:T(1,128)}', space=vmem, size = 0x12000, scoped, tag = 'internal scratch']
  %s0 = inlined_call_operand.vmem [shape: f32[32,8], index: 0, kind: input, shape index: {}]
  %s1 = inlined_call_operand.vmem [shape: f32[4,8,32], index: 1, kind: input, shape index: {}]
  %s2 = inlined_call_operand.vmem [shape: f32[4,32], index: 2, kind: input, shape index: {}]
  %s3 = inlined_call_operand.vmem [shape: f32[4,32], index: 3, kind: input, shape index: {}]
  %s4 = inlined_call_operand.hbm [shape: f32[4,32,32], index: 4, kind: output, shape index: {0}]
  %s5 = inlined_call_operand.hbm [shape: f32[4,1,32], index: 5, kind: output, shape index: {1}]
  %s6 = inlined_call_operand.vmem [shape: f32[4,32,1], index: 6, kind: output, shape index: {2}]
  %7 = xla_tuple %s4, %s5, %s6
  %s8 = sld [smem:[#allocation0]]
  $region42: #{tpu_custom_call.1} parent=0
    _
  %s10 = ssub.s32 1, %s8
  %s11 = scalar_select 0, %s10, %s8
  $region1: #{tpu_custom_call.1} parent=0
    #allocation2 [shape = 'u8[65536]{0}', space=vmem, size = 0x10000, scoped, tag = 'output window, operand 0, single buffered']
    #allocation3 [shape = 's32[1]{0}', space=sflag, size = 0x4, scoped, tag = 'scoped memory for tpu_custom_call.1']
    #allocation4 [shape = 'u8[2048]{0}', space=vmem, size = 0x800, scoped, tag = 'output window, operand 1, single buffered']
    #allocation5 [shape = 's32[1]{0}', space=sflag, size = 0x4, scoped, tag = 'scoped memory for tpu_custom_call.1']
    %12 = vsyncpa [#allocation3], 0
    %13 = vsyncpa [#allocation5], 0
    // Predicated region
    $region2: #{tpu_custom_call.1} parent=1 // pred_check
      _
    $region3: #{tpu_custom_call.1} parent=1 // pred_check_branch
      %15 = sbr.rel (0) target = $region5
    $region4: #{tpu_custom_call.1} parent=1 // pred_region
      _
    $region5: #{tpu_custom_call.1} parent=1 // pred_fallthru
      _
    // Predicated region
    $region6: #{tpu_custom_call.1} parent=1 // pred_check
      _
    $region7: #{tpu_custom_call.1} parent=1 // pred_check_branch
      %17 = sbr.rel (0) target = $region9
    $region8: #{tpu_custom_call.1} parent=1 // pred_region
      _
    $region9: #{tpu_custom_call.1} parent=1 // pred_fallthru
      _
    // Predicated region
    $region10: #{tpu_custom_call.1} parent=1 // pred_check
      _
    $region11: #{tpu_custom_call.1} parent=1 // pred_check_branch
      %19 = sbr.rel (0) target = $region13
    $region12: #{tpu_custom_call.1} parent=1 // pred_region
      _
    $region13: #{tpu_custom_call.1} parent=1 // pred_fallthru
      _
    // Predicated region
    $region14: #{tpu_custom_call.1} parent=1 // pred_check
      _
    $region15: #{tpu_custom_call.1} parent=1 // pred_check_branch
      %21 = sbr.rel (0) target = $region17
    $region16: #{tpu_custom_call.1} parent=1 // pred_region
      _
    $region17: #{tpu_custom_call.1} parent=1 // pred_fallthru
      _
    %v22 = vld [vmem:[%s0] sm:$0xff]
    %v23 = vld [vmem:[%s0 + $0x8] sm:$0xff]
    %v24 = vld [vmem:[%s0 + $0x10] sm:$0xff]
    %v25 = vld [vmem:[%s0 + $0x18] sm:$0xff]
    %v26 = vld [vmem:[%s2] sm:$0xf]
    %v27 = vld [vmem:[%s3] sm:$0xf]
    %v28 = vld [vmem:[%s1] sm:$0xff]
    %vm29 = vcmask 64512
    %v31 = vsel %vm29, %v22, 0
    %v34 = vsel %vm29, %v23, 0
    %v37 = vsel %vm29, %v24, 0
    %v40 = vsel %vm29, %v25, 0
    %42 = vmatprep.subr.mxu0 0.0
    %43 = vmatpush1.msra.mxu0 %v28
    %44 = vmatprep.subr.mxu0 0.0
    %45 = vmatpush1.msra.mxu0 0.0
    %46 = vmatprep.subr.mxu0 0.0
    %47 = vmatpush1.msra.mxu0 0.0
    %48 = vmatprep.subr.mxu0 0.0
    %49 = vmatpush1.msra.mxu0 0.0
    %50 = vmatprep.subr.mxu0 0.0
    %51 = vmatpush1.msra.mxu0 0.0
    %52 = vmatprep.subr.mxu0 0.0
    %53 = vmatpush1.msra.mxu0 0.0
    %54 = vmatprep.subr.mxu0 0.0
    %55 = vmatpush1.msra.mxu0 0.0
    %56 = vmatprep.subr.mxu0 0.0
    %57 = vmatpush1.msra.mxu0 0.0
    %58 = vmatprep.subr.mxu0 0.0
    %59 = vmatpush1.msra.mxu0 0.0
    %60 = vmatprep.subr.mxu0 0.0
    %61 = vmatpush1.msra.mxu0 0.0
    %62 = vmatprep.subr.mxu0 0.0
    %63 = vmatpush1.msra.mxu0 0.0
    %64 = vmatprep.subr.mxu0 0.0
    %65 = vmatpush1.msra.mxu0 0.0
    %66 = vmatprep.subr.mxu0 0.0
    %67 = vmatpush1.msra.mxu0 0.0
    %68 = vmatprep.subr.mxu0 0.0
    %69 = vmatpush1.msra.mxu0 0.0
    %70 = vmatprep.subr.mxu0 0.0
    %71 = vmatpush1.msra.mxu0 0.0
    %72 = vmatprep.subr.mxu0 0.0
    %73 = vmatpush1.msra.mxu0 0.0
    %74 = vmatprep.subr.mxu0 0.0
    %75 = vmatpush1.msra.mxu0 0.0
    %76 = vmatprep.subr.mxu0 0.0
    %77 = vmatpush1.msra.mxu0 0.0
    %78 = vmatprep.subr.mxu0 0.0
    %79 = vmatpush1.msra.mxu0 0.0
    %80 = vmatprep.subr.mxu0 0.0
    %81 = vmatpush1.msra.mxu0 0.0
    %82 = vmatprep.subr.mxu0 0.0
    %83 = vmatpush1.msra.mxu0 0.0
    %84 = vmatprep.subr.mxu0 0.0
    %85 = vmatpush1.msra.mxu0 0.0
    %86 = vmatprep.subr.mxu0 0.0
    %87 = vmatpush1.msra.mxu0 0.0
    %88 = vmatprep.subr.mxu0 0.0
    %89 = vmatpush1.msra.mxu0 0.0
    %90 = vmatprep.subr.mxu0 0.0
    %91 = vmatpush1.msra.mxu0 0.0
    %92 = vmatprep.subr.mxu0 0.0
    %93 = vmatpush1.msra.mxu0 0.0
    %94 = vmatprep.subr.mxu0 0.0
    %95 = vmatpush1.msra.mxu0 0.0
    %96 = vmatprep.subr.mxu0 0.0
    %97 = vmatpush1.msra.mxu0 0.0
    %98 = vmatprep.subr.mxu0 0.0
    %99 = vmatpush1.msra.mxu0 0.0
    %100 = vmatprep.subr.mxu0 0.0
    %101 = vmatpush1.msra.mxu0 0.0
    %102 = vmatprep.subr.mxu0 0.0
    %103 = vmatpush1.msra.mxu0 0.0
    %104 = vmatprep.subr.mxu0 0.0
    %105 = vmatpush1.msra.mxu0 0.0
    %106 = vmatprep.mubr.f32.mxu0 0.0
    %107 = vmatmul.mubr.f32.gmra.mrb[0].mxu0 %v31
    %v108 = vpop.f32.mrb[0].mxu0
    %v109 = vadd.f32 0.0, %v108
    %v110 = vpop.f32.mrb[0].mxu0
    %111 = vmatprep.mubr.f32.mxu0 0.0
    %112 = vmatmul.mubr.f32.gmra.mrb[0].mxu0 %v34
    %v113 = vpop.f32.mrb[0].mxu0
    %v114 = vadd.f32 0.0, %v113
    %v115 = vpop.f32.mrb[0].mxu0
    %116 = vmatprep.mubr.f32.mxu0 0.0
    %117 = vmatmul.mubr.f32.gmra.mrb[0].mxu0 %v37
    %v118 = vpop.f32.mrb[0].mxu0
    %v119 = vadd.f32 0.0, %v118
    %v120 = vpop.f32.mrb[0].mxu0
    %121 = vmatprep.mubr.f32.mxu0 0.0
    %122 = vmatmul.mubr.f32.gmra.mrb[0].mxu0 %v40
    %v123 = vpop.f32.mrb[0].mxu0
    %v124 = vadd.f32 0.0, %v123
    %v125 = vpop.f32.mrb[0].mxu0
    %126 = vdwg.mxu0
    %vm127 = vcmask 261120
    %128 = vst.msk [vmem:[#allocation2] sm:$0xff] %vm127, %v109
    %129 = vst.msk [vmem:[#allocation2 + $0x8] sm:$0xff] %vm127, %v114
    %130 = vst.msk [vmem:[#allocation2 + $0x10] sm:$0xff] %vm127, %v119
    %131 = vst.msk [vmem:[#allocation2 + $0x18] sm:$0xff] %vm127, %v124
    %v132 = vlaneseq
    %v133 = vshrl.u32 %v132, 7
    %v134 = vsub.s32 0, %v133
    %v135 = vrot.slane %v27, %v134
    %v136 = vmul.f32 %v109, %v135
    %v137 = vmul.f32 %v114, %v135
    %v138 = vmul.f32 %v119, %v135
    %v139 = vmul.f32 %v124, %v135
    %v140 = vsel %vm127, %v136, 0.0
    %141 = vadd.xlane.f32.xlu0 %v140
    %v142 = vpop.xlane.xlu0 %141
    %v143 = vsel %vm127, %v137, 0.0
    %144 = vadd.xlane.f32.xlu0 %v143
    %v145 = vpop.xlane.xlu0 %144
    %v146 = vsel %vm127, %v138, 0.0
    %147 = vadd.xlane.f32.xlu0 %v146
    %v148 = vpop.xlane.xlu0 %147
    %v149 = vsel %vm127, %v139, 0.0
    %150 = vadd.xlane.f32.xlu0 %v149
    %v151 = vpop.xlane.xlu0 %150
    %vm152 = vcmask 7168
    %153 = vst.msk [vmem:[%s6] sm:$0xff] %vm152, %v142
    %154 = vst.msk [vmem:[%s6 + $0x8] sm:$0xff] %vm152, %v145
    %155 = vst.msk [vmem:[%s6 + $0x10] sm:$0xff] %vm152, %v148
    %156 = vst.msk [vmem:[%s6 + $0x18] sm:$0xff] %vm152, %v151
    %v158 = vsel %vm127, %v26, 0
    %v161 = vsel %vm127, %v109, 0
    %v164 = vsel %vm127, %v114, 0
    %v167 = vsel %vm127, %v119, 0
    %v170 = vsel %vm127, %v124, 0
    %172 = vmatprep.subr.mxu0 0.0
    %173 = vmatpush1.xpose.msra.mxu0 %v161
    %174 = vmatprep.subr.mxu0 0.0
    %175 = vmatpush1.xpose.msra.mxu0 %v164
    %176 = vmatprep.subr.mxu0 0.0
    %177 = vmatpush1.xpose.msra.mxu0 %v167
    %178 = vmatprep.subr.mxu0 0.0
    %179 = vmatpush1.xpose.msra.mxu0 %v170
    %180 = vmatprep.subr.mxu0 0.0
    %181 = vmatpush1.xpose.msra.mxu0 0.0
    %182 = vmatprep.subr.mxu0 0.0
    %183 = vmatpush1.xpose.msra.mxu0 0.0
    %184 = vmatprep.subr.mxu0 0.0
    %185 = vmatpush1.xpose.msra.mxu0 0.0
    %186 = vmatprep.subr.mxu0 0.0
    %187 = vmatpush1.xpose.msra.mxu0 0.0
    %188 = vmatprep.subr.mxu0 0.0
    %189 = vmatpush1.xpose.msra.mxu0 0.0
    %190 = vmatprep.subr.mxu0 0.0
    %191 = vmatpush1.xpose.msra.mxu0 0.0
    %192 = vmatprep.subr.mxu0 0.0
    %193 = vmatpush1.xpose.msra.mxu0 0.0
    %194 = vmatprep.subr.mxu0 0.0
    %195 = vmatpush1.xpose.msra.mxu0 0.0
    %196 = vmatprep.subr.mxu0 0.0
    %197 = vmatpush1.xpose.msra.mxu0 0.0
    %198 = vmatprep.subr.mxu0 0.0
    %199 = vmatpush1.xpose.msra.mxu0 0.0
    %200 = vmatprep.subr.mxu0 0.0
    %201 = vmatpush1.xpose.msra.mxu0 0.0
    %202 = vmatprep.subr.mxu0 0.0
    %203 = vmatpush1.xpose.msra.mxu0 0.0
    %204 = vmatprep.subr.mxu0 0.0
    %205 = vmatpush1.xpose.msra.mxu0 0.0
    %206 = vmatprep.subr.mxu0 0.0
    %207 = vmatpush1.xpose.msra.mxu0 0.0
    %208 = vmatprep.subr.mxu0 0.0
    %209 = vmatpush1.xpose.msra.mxu0 0.0
    %210 = vmatprep.subr.mxu0 0.0
    %211 = vmatpush1.xpose.msra.mxu0 0.0
    %212 = vmatprep.subr.mxu0 0.0
    %213 = vmatpush1.xpose.msra.mxu0 0.0
    %214 = vmatprep.subr.mxu0 0.0
    %215 = vmatpush1.xpose.msra.mxu0 0.0
    %216 = vmatprep.subr.mxu0 0.0
    %217 = vmatpush1.xpose.msra.mxu0 0.0
    %218 = vmatprep.subr.mxu0 0.0
    %219 = vmatpush1.xpose.msra.mxu0 0.0
    %220 = vmatprep.subr.mxu0 0.0
    %221 = vmatpush1.xpose.msra.mxu0 0.0
    %222 = vmatprep.subr.mxu0 0.0
    %223 = vmatpush1.xpose.msra.mxu0 0.0
    %224 = vmatprep.subr.mxu0 0.0
    %225 = vmatpush1.xpose.msra.mxu0 0.0
    %226 = vmatprep.subr.mxu0 0.0
    %227 = vmatpush1.xpose.msra.mxu0 0.0
    %228 = vmatprep.subr.mxu0 0.0
    %229 = vmatpush1.xpose.msra.mxu0 0.0
    %230 = vmatprep.subr.mxu0 0.0
    %231 = vmatpush1.xpose.msra.mxu0 0.0
    %232 = vmatprep.subr.mxu0 0.0
    %233 = vmatpush1.xpose.msra.mxu0 0.0
    %234 = vmatprep.subr.mxu0 0.0
    %235 = vmatpush1.xpose.msra.mxu0 0.0
    %236 = vmatprep.mubr.f32.mxu0 0.0
    %237 = vmatmul.mubr.f32.gmra.mrb[0].mxu0 %v158
    %v238 = vpop.f32.mrb[0].mxu0
    %v239 = vadd.f32 0.0, %v238
    %v240 = vpop.f32.mrb[0].mxu0
    %241 = vdwg.mxu0
    %vm242 = vcmask 253952
    %243 = vst.msk [vmem:[#allocation4] sm:$0x1] %vm242, %v239
    %s244 = scalar_lea.vmem %s1, 8
    %v245 = vld [vmem:[%s244] sm:$0xff]
    %246 = vmatprep.subr.mxu0 0.0
    %247 = vmatpush1.msra.mxu0 %v245
    %248 = vmatprep.subr.mxu0 0.0
    %249 = vmatpush1.msra.mxu0 0.0
    %250 = vmatprep.subr.mxu0 0.0
    %251 = vmatpush1.msra.mxu0 0.0
    %252 = vmatprep.subr.mxu0 0.0
    %253 = vmatpush1.msra.mxu0 0.0
    %254 = vmatprep.subr.mxu0 0.0
    %255 = vmatpush1.msra.mxu0 0.0
    %256 = vmatprep.subr.mxu0 0.0
    %257 = vmatpush1.msra.mxu0 0.0
    %258 = vmatprep.subr.mxu0 0.0
    %259 = vmatpush1.msra.mxu0 0.0
    %260 = vmatprep.subr.mxu0 0.0
    %261 = vmatpush1.msra.mxu0 0.0
    %262 = vmatprep.subr.mxu0 0.0
    %263 = vmatpush1.msra.mxu0 0.0
    %264 = vmatprep.subr.mxu0 0.0
    %265 = vmatpush1.msra.mxu0 0.0
    %266 = vmatprep.subr.mxu0 0.0
    %267 = vmatpush1.msra.mxu0 0.0
    %268 = vmatprep.subr.mxu0 0.0
    %269 = vmatpush1.msra.mxu0 0.0
    %270 = vmatprep.subr.mxu0 0.0
    %271 = vmatpush1.msra.mxu0 0.0
    %272 = vmatprep.subr.mxu0 0.0
    %273 = vmatpush1.msra.mxu0 0.0
    %274 = vmatprep.subr.mxu0 0.0
    %275 = vmatpush1.msra.mxu0 0.0
    %276 = vmatprep.subr.mxu0 0.0
    %277 = vmatpush1.msra.mxu0 0.0
    %278 = vmatprep.subr.mxu0 0.0
    %279 = vmatpush1.msra.mxu0 0.0
    %280 = vmatprep.subr.mxu0 0.0
    %281 = vmatpush1.msra.mxu0 0.0
    %282 = vmatprep.subr.mxu0 0.0
    %283 = vmatpush1.msra.mxu0 0.0
    %284 = vmatprep.subr.mxu0 0.0
    %285 = vmatpush1.msra.mxu0 0.0
    %286 = vmatprep.subr.mxu0 0.0
    %287 = vmatpush1.msra.mxu0 0.0
    %288 = vmatprep.subr.mxu0 0.0
    %289 = vmatpush1.msra.mxu0 0.0
    %290 = vmatprep.subr.mxu0 0.0
    %291 = vmatpush1.msra.mxu0 0.0
    %292 = vmatprep.subr.mxu0 0.0
    %293 = vmatpush1.msra.mxu0 0.0
    %294 = vmatprep.subr.mxu0 0.0
    %295 = vmatpush1.msra.mxu0 0.0
    %296 = vmatprep.subr.mxu0 0.0
    %297 = vmatpush1.msra.mxu0 0.0
    %298 = vmatprep.subr.mxu0 0.0
    %299 = vmatpush1.msra.mxu0 0.0
    %300 = vmatprep.subr.mxu0 0.0
    %301 = vmatpush1.msra.mxu0 0.0
    %302 = vmatprep.subr.mxu0 0.0
    %303 = vmatpush1.msra.mxu0 0.0
    %304 = vmatprep.subr.mxu0 0.0
    %305 = vmatpush1.msra.mxu0 0.0
    %306 = vmatprep.subr.mxu0 0.0
    %307 = vmatpush1.msra.mxu0 0.0
    %308 = vmatprep.subr.mxu0 0.0
    %309 = vmatpush1.msra.mxu0 0.0
    %310 = vmatprep.mubr.f32.mxu0 0.0
    %311 = vmatmul.mubr.f32.gmra.mrb[0].mxu0 %v31
    %v312 = vpop.f32.mrb[0].mxu0
    %v313 = vadd.f32 0.0, %v312
    %v314 = vpop.f32.mrb[0].mxu0
    %315 = vmatprep.mubr.f32.mxu0 0.0
    %316 = vmatmul.mubr.f32.gmra.mrb[0].mxu0 %v34
    %v317 = vpop.f32.mrb[0].mxu0
    %v318 = vadd.f32 0.0, %v317
    %v319 = vpop.f32.mrb[0].mxu0
    %320 = vmatprep.mubr.f32.mxu0 0.0
    %321 = vmatmul.mubr.f32.gmra.mrb[0].mxu0 %v37
    %v322 = vpop.f32.mrb[0].mxu0
    %v323 = vadd.f32 0.0, %v322
    %v324 = vpop.f32.mrb[0].mxu0
    %325 = vmatprep.mubr.f32.mxu0 0.0
    %326 = vmatmul.mubr.f32.gmra.mrb[0].mxu0 %v40
    %v327 = vpop.f32.mrb[0].mxu0
    %v328 = vadd.f32 0.0, %v327
    %v329 = vpop.f32.mrb[0].mxu0
    %330 = vdwg.mxu0
    %s331 = scalar_lea.vmem [#allocation2], 32
    %332 = vst.msk [vmem:[%s331] sm:$0xff] %vm127, %v313
    %333 = vst.msk [vmem:[%s331 + $0x8] sm:$0xff] %vm127, %v318
    %334 = vst.msk [vmem:[%s331 + $0x10] sm:$0xff] %vm127, %v323
    %335 = vst.msk [vmem:[%s331 + $0x18] sm:$0xff] %vm127, %v328
    %v336 = vlaneseq
    %v337 = vshrl.u32 %v336, 7
    %v338 = vsub.s32 1, %v337
    %v339 = vrot.slane %v27, %v338
    %v340 = vmul.f32 %v313, %v339
    %v341 = vmul.f32 %v318, %v339
    %v342 = vmul.f32 %v323, %v339
    %v343 = vmul.f32 %v328, %v339
    %v344 = vsel %vm127, %v340, 0.0
    %345 = vadd.xlane.f32.xlu0 %v344
    %v346 = vpop.xlane.xlu0 %345
    %v347 = vsel %vm127, %v341, 0.0
    %348 = vadd.xlane.f32.xlu0 %v347
    %v349 = vpop.xlane.xlu0 %348
    %v350 = vsel %vm127, %v342, 0.0
    %351 = vadd.xlane.f32.xlu0 %v350
    %v352 = vpop.xlane.xlu0 %351
    %v353 = vsel %vm127, %v343, 0.0
    %354 = vadd.xlane.f32.xlu0 %v353
    %v355 = vpop.xlane.xlu0 %354
    %s356 = scalar_lea.vmem %s6, 32
    %357 = vst.msk [vmem:[%s356] sm:$0xff] %vm152, %v346
    %358 = vst.msk [vmem:[%s356 + $0x8] sm:$0xff] %vm152, %v349
    %359 = vst.msk [vmem:[%s356 + $0x10] sm:$0xff] %vm152, %v352
    %360 = vst.msk [vmem:[%s356 + $0x18] sm:$0xff] %vm152, %v355
    %v361 = vrot.slane %v26, 1
    %v362 = vsel %vm127, %v361, 0
    %v365 = vsel %vm127, %v313, 0
    %v368 = vsel %vm127, %v318, 0
    %v371 = vsel %vm127, %v323, 0
    %v374 = vsel %vm127, %v328, 0
    %376 = vmatprep.subr.mxu0 0.0
    %377 = vmatpush1.xpose.msra.mxu0 %v365
    %378 = vmatprep.subr.mxu0 0.0
    %379 = vmatpush1.xpose.msra.mxu0 %v368
    %380 = vmatprep.subr.mxu0 0.0
    %381 = vmatpush1.xpose.msra.mxu0 %v371
    %382 = vmatprep.subr.mxu0 0.0
    %383 = vmatpush1.xpose.msra.mxu0 %v374
    %384 = vmatprep.subr.mxu0 0.0
    %385 = vmatpush1.xpose.msra.mxu0 0.0
    %386 = vmatprep.subr.mxu0 0.0
    %387 = vmatpush1.xpose.msra.mxu0 0.0
    %388 = vmatprep.subr.mxu0 0.0
    %389 = vmatpush1.xpose.msra.mxu0 0.0
    %390 = vmatprep.subr.mxu0 0.0
    %391 = vmatpush1.xpose.msra.mxu0 0.0
    %392 = vmatprep.subr.mxu0 0.0
    %393 = vmatpush1.xpose.msra.mxu0 0.0
    %394 = vmatprep.subr.mxu0 0.0
    %395 = vmatpush1.xpose.msra.mxu0 0.0
    %396 = vmatprep.subr.mxu0 0.0
    %397 = vmatpush1.xpose.msra.mxu0 0.0
    %398 = vmatprep.subr.mxu0 0.0
    %399 = vmatpush1.xpose.msra.mxu0 0.0
    %400 = vmatprep.subr.mxu0 0.0
    %401 = vmatpush1.xpose.msra.mxu0 0.0
    %402 = vmatprep.subr.mxu0 0.0
    %403 = vmatpush1.xpose.msra.mxu0 0.0
    %404 = vmatprep.subr.mxu0 0.0
    %405 = vmatpush1.xpose.msra.mxu0 0.0
    %406 = vmatprep.subr.mxu0 0.0
    %407 = vmatpush1.xpose.msra.mxu0 0.0
    %408 = vmatprep.subr.mxu0 0.0
    %409 = vmatpush1.xpose.msra.mxu0 0.0
    %410 = vmatprep.subr.mxu0 0.0
    %411 = vmatpush1.xpose.msra.mxu0 0.0
    %412 = vmatprep.subr.mxu0 0.0
    %413 = vmatpush1.xpose.msra.mxu0 0.0
    %414 = vmatprep.subr.mxu0 0.0
    %415 = vmatpush1.xpose.msra.mxu0 0.0
    %416 = vmatprep.subr.mxu0 0.0
    %417 = vmatpush1.xpose.msra.mxu0 0.0
    %418 = vmatprep.subr.mxu0 0.0
    %419 = vmatpush1.xpose.msra.mxu0 0.0
    %420 = vmatprep.subr.mxu0 0.0
    %421 = vmatpush1.xpose.msra.mxu0 0.0
    %422 = vmatprep.subr.mxu0 0.0
    %423 = vmatpush1.xpose.msra.mxu0 0.0
    %424 = vmatprep.subr.mxu0 0.0
    %425 = vmatpush1.xpose.msra.mxu0 0.0
    %426 = vmatprep.subr.mxu0 0.0
    %427 = vmatpush1.xpose.msra.mxu0 0.0
    %428 = vmatprep.subr.mxu0 0.0
    %429 = vmatpush1.xpose.msra.mxu0 0.0
    %430 = vmatprep.subr.mxu0 0.0
    %431 = vmatpush1.xpose.msra.mxu0 0.0
    %432 = vmatprep.subr.mxu0 0.0
    %433 = vmatpush1.xpose.msra.mxu0 0.0
    %434 = vmatprep.subr.mxu0 0.0
    %435 = vmatpush1.xpose.msra.mxu0 0.0
    %436 = vmatprep.subr.mxu0 0.0
    %437 = vmatpush1.xpose.msra.mxu0 0.0
    %438 = vmatprep.subr.mxu0 0.0
    %439 = vmatpush1.xpose.msra.mxu0 0.0
    %440 = vmatprep.mubr.f32.mxu0 0.0
    %441 = vmatmul.mubr.f32.gmra.mrb[0].mxu0 %v362
    %v442 = vpop.f32.mrb[0].mxu0
    %v443 = vadd.f32 0.0, %v442
    %v444 = vpop.f32.mrb[0].mxu0
    %445 = vdwg.mxu0
    %s446 = scalar_lea.vmem [#allocation4], 1
    %447 = vst.msk [vmem:[%s446] sm:$0x1] %vm242, %v443
    %s448 = scalar_lea.vmem %s1, 16
    %v449 = vld [vmem:[%s448] sm:$0xff]
    %450 = vmatprep.subr.mxu0 0.0
    %451 = vmatpush1.msra.mxu0 %v449
    %452 = vmatprep.subr.mxu0 0.0
    %453 = vmatpush1.msra.mxu0 0.0
    %454 = vmatprep.subr.mxu0 0.0
    %455 = vmatpush1.msra.mxu0 0.0
    %456 = vmatprep.subr.mxu0 0.0
    %457 = vmatpush1.msra.mxu0 0.0
    %458 = vmatprep.subr.mxu0 0.0
    %459 = vmatpush1.msra.mxu0 0.0
    %460 = vmatprep.subr.mxu0 0.0
    %461 = vmatpush1.msra.mxu0 0.0
    %462 = vmatprep.subr.mxu0 0.0
    %463 = vmatpush1.msra.mxu0 0.0
    %464 = vmatprep.subr.mxu0 0.0
    %465 = vmatpush1.msra.mxu0 0.0
    %466 = vmatprep.subr.mxu0 0.0
    %467 = vmatpush1.msra.mxu0 0.0
    %468 = vmatprep.subr.mxu0 0.0
    %469 = vmatpush1.msra.mxu0 0.0
    %470 = vmatprep.subr.mxu0 0.0
    %471 = vmatpush1.msra.mxu0 0.0
    %472 = vmatprep.subr.mxu0 0.0
    %473 = vmatpush1.msra.mxu0 0.0
    %474 = vmatprep.subr.mxu0 0.0
    %475 = vmatpush1.msra.mxu0 0.0
    %476 = vmatprep.subr.mxu0 0.0
    %477 = vmatpush1.msra.mxu0 0.0
    %478 = vmatprep.subr.mxu0 0.0
    %479 = vmatpush1.msra.mxu0 0.0
    %480 = vmatprep.subr.mxu0 0.0
    %481 = vmatpush1.msra.mxu0 0.0
    %482 = vmatprep.subr.mxu0 0.0
    %483 = vmatpush1.msra.mxu0 0.0
    %484 = vmatprep.subr.mxu0 0.0
    %485 = vmatpush1.msra.mxu0 0.0
    %486 = vmatprep.subr.mxu0 0.0
    %487 = vmatpush1.msra.mxu0 0.0
    %488 = vmatprep.subr.mxu0 0.0
    %489 = vmatpush1.msra.mxu0 0.0
    %490 = vmatprep.subr.mxu0 0.0
    %491 = vmatpush1.msra.mxu0 0.0
    %492 = vmatprep.subr.mxu0 0.0
    %493 = vmatpush1.msra.mxu0 0.0
    %494 = vmatprep.subr.mxu0 0.0
    %495 = vmatpush1.msra.mxu0 0.0
    %496 = vmatprep.subr.mxu0 0.0
    %497 = vmatpush1.msra.mxu0 0.0
    %498 = vmatprep.subr.mxu0 0.0
    %499 = vmatpush1.msra.mxu0 0.0
    %500 = vmatprep.subr.mxu0 0.0
    %501 = vmatpush1.msra.mxu0 0.0
    %502 = vmatprep.subr.mxu0 0.0
    %503 = vmatpush1.msra.mxu0 0.0
    %504 = vmatprep.subr.mxu0 0.0
    %505 = vmatpush1.msra.mxu0 0.0
    %506 = vmatprep.subr.mxu0 0.0
    %507 = vmatpush1.msra.mxu0 0.0
    %508 = vmatprep.subr.mxu0 0.0
    %509 = vmatpush1.msra.mxu0 0.0
    %510 = vmatprep.subr.mxu0 0.0
    %511 = vmatpush1.msra.mxu0 0.0
    %512 = vmatprep.subr.mxu0 0.0
    %513 = vmatpush1.msra.mxu0 0.0
    %514 = vmatprep.mubr.f32.mxu0 0.0
    %515 = vmatmul.mubr.f32.gmra.mrb[0].mxu0 %v31
    %v516 = vpop.f32.mrb[0].mxu0
    %v517 = vadd.f32 0.0, %v516
    %v518 = vpop.f32.mrb[0].mxu0
    %519 = vmatprep.mubr.f32.mxu0 0.0
    %520 = vmatmul.mubr.f32.gmra.mrb[0].mxu0 %v34
    %v521 = vpop.f32.mrb[0].mxu0
    %v522 = vadd.f32 0.0, %v521
    %v523 = vpop.f32.mrb[0].mxu0
    %524 = vmatprep.mubr.f32.mxu0 0.0
    %525 = vmatmul.mubr.f32.gmra.mrb[0].mxu0 %v37
    %v526 = vpop.f32.mrb[0].mxu0
    %v527 = vadd.f32 0.0, %v526
    %v528 = vpop.f32.mrb[0].mxu0
    %529 = vmatprep.mubr.f32.mxu0 0.0
    %530 = vmatmul.mubr.f32.gmra.mrb[0].mxu0 %v40
    %v531 = vpop.f32.mrb[0].mxu0
    %v532 = vadd.f32 0.0, %v531
    %v533 = vpop.f32.mrb[0].mxu0
    %534 = vdwg.mxu0
    %s535 = scalar_lea.vmem [#allocation2], 64
    %536 = vst.msk [vmem:[%s535] sm:$0xff] %vm127, %v517
    %537 = vst.msk [vmem:[%s535 + $0x8] sm:$0xff] %vm127, %v522
    %538 = vst.msk [vmem:[%s535 + $0x10] sm:$0xff] %vm127, %v527
    %539 = vst.msk [vmem:[%s535 + $0x18] sm:$0xff] %vm127, %v532
    %v540 = vlaneseq
    %v541 = vshrl.u32 %v540, 7
    %v542 = vsub.s32 2, %v541
    %v543 = vrot.slane %v27, %v542
    %v544 = vmul.f32 %v517, %v543
    %v545 = vmul.f32 %v522, %v543
    %v546 = vmul.f32 %v527, %v543
    %v547 = vmul.f32 %v532, %v543
    %v548 = vsel %vm127, %v544, 0.0
    %549 = vadd.xlane.f32.xlu0 %v548
    %v550 = vpop.xlane.xlu0 %549
    %v551 = vsel %vm127, %v545, 0.0
    %552 = vadd.xlane.f32.xlu0 %v551
    %v553 = vpop.xlane.xlu0 %552
    %v554 = vsel %vm127, %v546, 0.0
    %555 = vadd.xlane.f32.xlu0 %v554
    %v556 = vpop.xlane.xlu0 %555
    %v557 = vsel %vm127, %v547, 0.0
    %558 = vadd.xlane.f32.xlu0 %v557
    %v559 = vpop.xlane.xlu0 %558
    %s560 = scalar_lea.vmem %s6, 64
    %561 = vst.msk [vmem:[%s560] sm:$0xff] %vm152, %v550
    %562 = vst.msk [vmem:[%s560 + $0x8] sm:$0xff] %vm152, %v553
    %563 = vst.msk [vmem:[%s560 + $0x10] sm:$0xff] %vm152, %v556
    %564 = vst.msk [vmem:[%s560 + $0x18] sm:$0xff] %vm152, %v559
    %v565 = vrot.slane %v26, 2
    %v566 = vsel %vm127, %v565, 0
    %v569 = vsel %vm127, %v517, 0
    %v572 = vsel %vm127, %v522, 0
    %v575 = vsel %vm127, %v527, 0
    %v578 = vsel %vm127, %v532, 0
    %580 = vmatprep.subr.mxu0 0.0
    %581 = vmatpush1.xpose.msra.mxu0 %v569
    %582 = vmatprep.subr.mxu0 0.0
    %583 = vmatpush1.xpose.msra.mxu0 %v572
    %584 = vmatprep.subr.mxu0 0.0
    %585 = vmatpush1.xpose.msra.mxu0 %v575
    %586 = vmatprep.subr.mxu0 0.0
    %587 = vmatpush1.xpose.msra.mxu0 %v578
    %588 = vmatprep.subr.mxu0 0.0
    %589 = vmatpush1.xpose.msra.mxu0 0.0
    %590 = vmatprep.subr.mxu0 0.0
    %591 = vmatpush1.xpose.msra.mxu0 0.0
    %592 = vmatprep.subr.mxu0 0.0
    %593 = vmatpush1.xpose.msra.mxu0 0.0
    %594 = vmatprep.subr.mxu0 0.0
    %595 = vmatpush1.xpose.msra.mxu0 0.0
    %596 = vmatprep.subr.mxu0 0.0
    %597 = vmatpush1.xpose.msra.mxu0 0.0
    %598 = vmatprep.subr.mxu0 0.0
    %599 = vmatpush1.xpose.msra.mxu0 0.0
    %600 = vmatprep.subr.mxu0 0.0
    %601 = vmatpush1.xpose.msra.mxu0 0.0
    %602 = vmatprep.subr.mxu0 0.0
    %603 = vmatpush1.xpose.msra.mxu0 0.0
    %604 = vmatprep.subr.mxu0 0.0
    %605 = vmatpush1.xpose.msra.mxu0 0.0
    %606 = vmatprep.subr.mxu0 0.0
    %607 = vmatpush1.xpose.msra.mxu0 0.0
    %608 = vmatprep.subr.mxu0 0.0
    %609 = vmatpush1.xpose.msra.mxu0 0.0
    %610 = vmatprep.subr.mxu0 0.0
    %611 = vmatpush1.xpose.msra.mxu0 0.0
    %612 = vmatprep.subr.mxu0 0.0
    %613 = vmatpush1.xpose.msra.mxu0 0.0
    %614 = vmatprep.subr.mxu0 0.0
    %615 = vmatpush1.xpose.msra.mxu0 0.0
    %616 = vmatprep.subr.mxu0 0.0
    %617 = vmatpush1.xpose.msra.mxu0 0.0
    %618 = vmatprep.subr.mxu0 0.0
    %619 = vmatpush1.xpose.msra.mxu0 0.0
    %620 = vmatprep.subr.mxu0 0.0
    %621 = vmatpush1.xpose.msra.mxu0 0.0
    %622 = vmatprep.subr.mxu0 0.0
    %623 = vmatpush1.xpose.msra.mxu0 0.0
    %624 = vmatprep.subr.mxu0 0.0
    %625 = vmatpush1.xpose.msra.mxu0 0.0
    %626 = vmatprep.subr.mxu0 0.0
    %627 = vmatpush1.xpose.msra.mxu0 0.0
    %628 = vmatprep.subr.mxu0 0.0
    %629 = vmatpush1.xpose.msra.mxu0 0.0
    %630 = vmatprep.subr.mxu0 0.0
    %631 = vmatpush1.xpose.msra.mxu0 0.0
    %632 = vmatprep.subr.mxu0 0.0
    %633 = vmatpush1.xpose.msra.mxu0 0.0
    %634 = vmatprep.subr.mxu0 0.0
    %635 = vmatpush1.xpose.msra.mxu0 0.0
    %636 = vmatprep.subr.mxu0 0.0
    %637 = vmatpush1.xpose.msra.mxu0 0.0
    %638 = vmatprep.subr.mxu0 0.0
    %639 = vmatpush1.xpose.msra.mxu0 0.0
    %640 = vmatprep.subr.mxu0 0.0
    %641 = vmatpush1.xpose.msra.mxu0 0.0
    %642 = vmatprep.subr.mxu0 0.0
    %643 = vmatpush1.xpose.msra.mxu0 0.0
    %644 = vmatprep.mubr.f32.mxu0 0.0
    %645 = vmatmul.mubr.f32.gmra.mrb[0].mxu0 %v566
    %v646 = vpop.f32.mrb[0].mxu0
    %v647 = vadd.f32 0.0, %v646
    %v648 = vpop.f32.mrb[0].mxu0
    %649 = vdwg.mxu0
    %s650 = scalar_lea.vmem [#allocation4], 2
    %651 = vst.msk [vmem:[%s650] sm:$0x1] %vm242, %v647
    %s652 = scalar_lea.vmem %s1, 24
    %v653 = vld [vmem:[%s652] sm:$0xff]
    %654 = vmatprep.subr.mxu0 0.0
    %655 = vmatpush1.msra.mxu0 %v653
    %656 = vmatprep.subr.mxu0 0.0
    %657 = vmatpush1.msra.mxu0 0.0
    %658 = vmatprep.subr.mxu0 0.0
    %659 = vmatpush1.msra.mxu0 0.0
    %660 = vmatprep.subr.mxu0 0.0
    %661 = vmatpush1.msra.mxu0 0.0
    %662 = vmatprep.subr.mxu0 0.0
    %663 = vmatpush1.msra.mxu0 0.0
    %664 = vmatprep.subr.mxu0 0.0
    %665 = vmatpush1.msra.mxu0 0.0
    %666 = vmatprep.subr.mxu0 0.0
    %667 = vmatpush1.msra.mxu0 0.0
    %668 = vmatprep.subr.mxu0 0.0
    %669 = vmatpush1.msra.mxu0 0.0
    %670 = vmatprep.subr.mxu0 0.0
    %671 = vmatpush1.msra.mxu0 0.0
    %672 = vmatprep.subr.mxu0 0.0
    %673 = vmatpush1.msra.mxu0 0.0
    %674 = vmatprep.subr.mxu0 0.0
    %675 = vmatpush1.msra.mxu0 0.0
    %676 = vmatprep.subr.mxu0 0.0
    %677 = vmatpush1.msra.mxu0 0.0
    %678 = vmatprep.subr.mxu0 0.0
    %679 = vmatpush1.msra.mxu0 0.0
    %680 = vmatprep.subr.mxu0 0.0
    %681 = vmatpush1.msra.mxu0 0.0
    %682 = vmatprep.subr.mxu0 0.0
    %683 = vmatpush1.msra.mxu0 0.0
    %684 = vmatprep.subr.mxu0 0.0
    %685 = vmatpush1.msra.mxu0 0.0
    %686 = vmatprep.subr.mxu0 0.0
    %687 = vmatpush1.msra.mxu0 0.0
    %688 = vmatprep.subr.mxu0 0.0
    %689 = vmatpush1.msra.mxu0 0.0
    %690 = vmatprep.subr.mxu0 0.0
    %691 = vmatpush1.msra.mxu0 0.0
    %692 = vmatprep.subr.mxu0 0.0
    %693 = vmatpush1.msra.mxu0 0.0
    %694 = vmatprep.subr.mxu0 0.0
    %695 = vmatpush1.msra.mxu0 0.0
    %696 = vmatprep.subr.mxu0 0.0
    %697 = vmatpush1.msra.mxu0 0.0
    %698 = vmatprep.subr.mxu0 0.0
    %699 = vmatpush1.msra.mxu0 0.0
    %700 = vmatprep.subr.mxu0 0.0
    %701 = vmatpush1.msra.mxu0 0.0
    %702 = vmatprep.subr.mxu0 0.0
    %703 = vmatpush1.msra.mxu0 0.0
    %704 = vmatprep.subr.mxu0 0.0
    %705 = vmatpush1.msra.mxu0 0.0
    %706 = vmatprep.subr.mxu0 0.0
    %707 = vmatpush1.msra.mxu0 0.0
    %708 = vmatprep.subr.mxu0 0.0
    %709 = vmatpush1.msra.mxu0 0.0
    %710 = vmatprep.subr.mxu0 0.0
    %711 = vmatpush1.msra.mxu0 0.0
    %712 = vmatprep.subr.mxu0 0.0
    %713 = vmatpush1.msra.mxu0 0.0
    %714 = vmatprep.subr.mxu0 0.0
    %715 = vmatpush1.msra.mxu0 0.0
    %716 = vmatprep.subr.mxu0 0.0
    %717 = vmatpush1.msra.mxu0 0.0
    %718 = vmatprep.mubr.f32.mxu0 0.0
    %719 = vmatmul.mubr.f32.gmra.mrb[0].mxu0 %v31
    %v720 = vpop.f32.mrb[0].mxu0
    %v721 = vadd.f32 0.0, %v720
    %v722 = vpop.f32.mrb[0].mxu0
    %723 = vmatprep.mubr.f32.mxu0 0.0
    %724 = vmatmul.mubr.f32.gmra.mrb[0].mxu0 %v34
    %v725 = vpop.f32.mrb[0].mxu0
    %v726 = vadd.f32 0.0, %v725
    %v727 = vpop.f32.mrb[0].mxu0
    %728 = vmatprep.mubr.f32.mxu0 0.0
    %729 = vmatmul.mubr.f32.gmra.mrb[0].mxu0 %v37
    %v730 = vpop.f32.mrb[0].mxu0
    %v731 = vadd.f32 0.0, %v730
    %v732 = vpop.f32.mrb[0].mxu0
    %733 = vmatprep.mubr.f32.mxu0 0.0
    %734 = vmatmul.mubr.f32.gmra.mrb[0].mxu0 %v40
    %v735 = vpop.f32.mrb[0].mxu0
    %v736 = vadd.f32 0.0, %v735
    %v737 = vpop.f32.mrb[0].mxu0
    %738 = vdwg.mxu0
    %s739 = scalar_lea.vmem [#allocation2], 96
    %740 = vst.msk [vmem:[%s739] sm:$0xff] %vm127, %v721
    %741 = vst.msk [vmem:[%s739 + $0x8] sm:$0xff] %vm127, %v726
    %742 = vst.msk [vmem:[%s739 + $0x10] sm:$0xff] %vm127, %v731
    %743 = vst.msk [vmem:[%s739 + $0x18] sm:$0xff] %vm127, %v736
    %v744 = vlaneseq
    %v745 = vshrl.u32 %v744, 7
    %v746 = vsub.s32 3, %v745
    %v747 = vrot.slane %v27, %v746
    %v748 = vmul.f32 %v721, %v747
    %v749 = vmul.f32 %v726, %v747
    %v750 = vmul.f32 %v731, %v747
    %v751 = vmul.f32 %v736, %v747
    %v752 = vsel %vm127, %v748, 0.0
    %753 = vadd.xlane.f32.xlu0 %v752
    %v754 = vpop.xlane.xlu0 %753
    %v755 = vsel %vm127, %v749, 0.0
    %756 = vadd.xlane.f32.xlu0 %v755
    %v757 = vpop.xlane.xlu0 %756
    %v758 = vsel %vm127, %v750, 0.0
    %759 = vadd.xlane.f32.xlu0 %v758
    %v760 = vpop.xlane.xlu0 %759
    %v761 = vsel %vm127, %v751, 0.0
    %762 = vadd.xlane.f32.xlu0 %v761
    %v763 = vpop.xlane.xlu0 %762
    %s764 = scalar_lea.vmem %s6, 96
    %765 = vst.msk [vmem:[%s764] sm:$0xff] %vm152, %v754
    %766 = vst.msk [vmem:[%s764 + $0x8] sm:$0xff] %vm152, %v757
    %767 = vst.msk [vmem:[%s764 + $0x10] sm:$0xff] %vm152, %v760
    %768 = vst.msk [vmem:[%s764 + $0x18] sm:$0xff] %vm152, %v763
    %v769 = vrot.slane %v26, 3
    %v770 = vsel %vm127, %v769, 0
    %v773 = vsel %vm127, %v721, 0
    %v776 = vsel %vm127, %v726, 0
    %v779 = vsel %vm127, %v731, 0
    %v782 = vsel %vm127, %v736, 0
    %784 = vmatprep.subr.mxu0 0.0
    %785 = vmatpush1.xpose.msra.mxu0 %v773
    %786 = vmatprep.subr.mxu0 0.0
    %787 = vmatpush1.xpose.msra.mxu0 %v776
    %788 = vmatprep.subr.mxu0 0.0
    %789 = vmatpush1.xpose.msra.mxu0 %v779
    %790 = vmatprep.subr.mxu0 0.0
    %791 = vmatpush1.xpose.msra.mxu0 %v782
    %792 = vmatprep.subr.mxu0 0.0
    %793 = vmatpush1.xpose.msra.mxu0 0.0
    %794 = vmatprep.subr.mxu0 0.0
    %795 = vmatpush1.xpose.msra.mxu0 0.0
    %796 = vmatprep.subr.mxu0 0.0
    %797 = vmatpush1.xpose.msra.mxu0 0.0
    %798 = vmatprep.subr.mxu0 0.0
    %799 = vmatpush1.xpose.msra.mxu0 0.0
    %800 = vmatprep.subr.mxu0 0.0
    %801 = vmatpush1.xpose.msra.mxu0 0.0
    %802 = vmatprep.subr.mxu0 0.0
    %803 = vmatpush1.xpose.msra.mxu0 0.0
    %804 = vmatprep.subr.mxu0 0.0
    %805 = vmatpush1.xpose.msra.mxu0 0.0
    %806 = vmatprep.subr.mxu0 0.0
    %807 = vmatpush1.xpose.msra.mxu0 0.0
    %808 = vmatprep.subr.mxu0 0.0
    %809 = vmatpush1.xpose.msra.mxu0 0.0
    %810 = vmatprep.subr.mxu0 0.0
    %811 = vmatpush1.xpose.msra.mxu0 0.0
    %812 = vmatprep.subr.mxu0 0.0
    %813 = vmatpush1.xpose.msra.mxu0 0.0
    %814 = vmatprep.subr.mxu0 0.0
    %815 = vmatpush1.xpose.msra.mxu0 0.0
    %816 = vmatprep.subr.mxu0 0.0
    %817 = vmatpush1.xpose.msra.mxu0 0.0
    %818 = vmatprep.subr.mxu0 0.0
    %819 = vmatpush1.xpose.msra.mxu0 0.0
    %820 = vmatprep.subr.mxu0 0.0
    %821 = vmatpush1.xpose.msra.mxu0 0.0
    %822 = vmatprep.subr.mxu0 0.0
    %823 = vmatpush1.xpose.msra.mxu0 0.0
    %824 = vmatprep.subr.mxu0 0.0
    %825 = vmatpush1.xpose.msra.mxu0 0.0
    %826 = vmatprep.subr.mxu0 0.0
    %827 = vmatpush1.xpose.msra.mxu0 0.0
    %828 = vmatprep.subr.mxu0 0.0
    %829 = vmatpush1.xpose.msra.mxu0 0.0
    %830 = vmatprep.subr.mxu0 0.0
    %831 = vmatpush1.xpose.msra.mxu0 0.0
    %832 = vmatprep.subr.mxu0 0.0
    %833 = vmatpush1.xpose.msra.mxu0 0.0
    %834 = vmatprep.subr.mxu0 0.0
    %835 = vmatpush1.xpose.msra.mxu0 0.0
    %836 = vmatprep.subr.mxu0 0.0
    %837 = vmatpush1.xpose.msra.mxu0 0.0
    %838 = vmatprep.subr.mxu0 0.0
    %839 = vmatpush1.xpose.msra.mxu0 0.0
    %840 = vmatprep.subr.mxu0 0.0
    %841 = vmatpush1.xpose.msra.mxu0 0.0
    %842 = vmatprep.subr.mxu0 0.0
    %843 = vmatpush1.xpose.msra.mxu0 0.0
    %844 = vmatprep.subr.mxu0 0.0
    %845 = vmatpush1.xpose.msra.mxu0 0.0
    %846 = vmatprep.subr.mxu0 0.0
    %847 = vmatpush1.xpose.msra.mxu0 0.0
    %848 = vmatprep.mubr.f32.mxu0 0.0
    %849 = vmatmul.mubr.f32.gmra.mrb[0].mxu0 %v770
    %v850 = vpop.f32.mrb[0].mxu0
    %v851 = vadd.f32 0.0, %v850
    %v852 = vpop.f32.mrb[0].mxu0
    %853 = vdwg.mxu0
    %s854 = scalar_lea.vmem [#allocation4], 3
    %855 = vst.msk [vmem:[%s854] sm:$0x1] %vm242, %v851
    // Predicated region
    $region18: #{tpu_custom_call.1} parent=1 // pred_check
      _
    $region19: #{tpu_custom_call.1} parent=1 // pred_check_branch
      %857 = sbr.rel (0) target = $region21
    $region20: #{tpu_custom_call.1} parent=1 // pred_region
      %s859 = ssub.s32 2048, 2048
      %860 = vsyncadd [#allocation3], %s859
      %s861 = sshll.u32 [#allocation2], 4
      %s862 = int_to_ptr.vmem [resolvable:$true] %s861
      %867 = dma.vmem_to_hbm [thread:$0]  %s862, 2048, %s4, [#allocation3], 128, 128, 8
    $region21: #{tpu_custom_call.1} parent=1 // pred_fallthru
      _
    // Predicated region
    $region22: #{tpu_custom_call.1} parent=1 // pred_check
      _
    $region23: #{tpu_custom_call.1} parent=1 // pred_check_branch
      %869 = sbr.rel (0) target = $region25
    $region24: #{tpu_custom_call.1} parent=1 // pred_region
      %s871 = ssub.s32 64, 64
      %872 = vsyncadd [#allocation5], %s871
      %s873 = sshll.u32 [#allocation4], 4
      %s874 = int_to_ptr.vmem [resolvable:$true] %s873
      %879 = dma.vmem_to_hbm [thread:$0]  %s874, 64, %s5, [#allocation5], 16, 16, 1
    $region25: #{tpu_custom_call.1} parent=1 // pred_fallthru
      _
    // Predicated region
    $region26: #{tpu_custom_call.1} parent=1 // pred_check
      _
    $region27: #{tpu_custom_call.1} parent=1 // pred_check_branch
      %881 = sbr.rel (0) target = $region29
    $region28: #{tpu_custom_call.1} parent=1 // pred_region
      _
    $region29: #{tpu_custom_call.1} parent=1 // pred_fallthru
      _
    // Predicated region
    $region30: #{tpu_custom_call.1} parent=1 // pred_check
      _
    $region31: #{tpu_custom_call.1} parent=1 // pred_check_branch
      %883 = sbr.rel (0) target = $region33
    $region32: #{tpu_custom_call.1} parent=1 // pred_region
      %884 = dma.done [#allocation3], 2048
    $region33: #{tpu_custom_call.1} parent=1 // pred_fallthru
      _
    // Predicated region
    $region34: #{tpu_custom_call.1} parent=1 // pred_check
      _
    $region35: #{tpu_custom_call.1} parent=1 // pred_check_branch
      %886 = sbr.rel (0) target = $region37
    $region36: #{tpu_custom_call.1} parent=1 // pred_region
      %887 = dma.done [#allocation5], 64
    $region37: #{tpu_custom_call.1} parent=1 // pred_fallthru
      _
    // Predicated region
    $region38: #{tpu_custom_call.1} parent=1 // pred_check
      _
    $region39: #{tpu_custom_call.1} parent=1 // pred_check_branch
      %889 = sbr.rel (0) target = $region41
    $region40: #{tpu_custom_call.1} parent=1 // pred_region
      _
    $region41: #{tpu_custom_call.1} parent=1 // pred_fallthru
      _
    %890 = vsyncpa [#allocation3], 1
    %891 = vsyncpa [#allocation5], 1

</llo_original>
